<compile_context>
chip_gen: v7x
topology: tpu7x:2x2x1
jax: 0.10.0
libtpu: 0.0.40
codegen_flags: <defaults>
</compile_context>

<pallas_src>
import functools

import jax
import jax.numpy as jnp
import numpy as np
from jax.experimental import pallas as pl
from jax.experimental.pallas import tpu as pltpu


def _vmem_limit_bytes():
    """~Half of the generation's physical VMEM, clamped to a sane range."""
    try:
        cap = int(pltpu.get_tpu_info().vmem_capacity_bytes)
    except Exception:
        cap = 64 * 1024 * 1024          # conservative fallback (v7x per-TC)
    return max(16 * 1024 * 1024, min(cap // 2, 96 * 1024 * 1024))


def _pick_hw_tile(hw, channels, itemsize, vmem_limit, max_hw_tile=None):
    """HW tile on the lane axis: full HW, or the largest multiple of 128 such
    that ~5 live blocks (2x in + 2x out double-buffered + slack) fit VMEM."""
    target = max(vmem_limit // 5, 1 << 20)
    t = target // max(1, channels * itemsize)
    if max_hw_tile is not None:
        t = min(t, max_hw_tile)
    if t >= hw:
        return hw
    t = max(128, (t // 128) * 128)
    return t if t < hw else hw


# --------------------------------------------------------------------------
# Fused single-pass kernel: pool + channel conv + sigmoid + scale per batch.
# --------------------------------------------------------------------------
def _eca_fused_kernel(w_ref, x_ref, o_ref, *, hw, k_size, channels):
    """w_ref: SMEM (k,) f32 taps; x_ref/o_ref: VMEM (1, C, HW)."""
    x = x_ref[0]                                                  # (C, HW)

    # Per-channel mean over the HW lane axis, accumulated in f32.
    pooled = jnp.sum(x.astype(jnp.float32), axis=-1, keepdims=True)
    pooled = pooled * jnp.float32(1.0 / hw)                       # (C, 1)

    # k-tap 1-D conv over channels (sublane axis) with zero padding:
    # conv[c] = sum_j w[j] * pooled[c + j - pad].
    pad = (k_size - 1) // 2
    ch = jax.lax.broadcasted_iota(jnp.int32, (channels, 1), 0)
    conv = jnp.zeros_like(pooled)
    for j in range(k_size):
        off = j - pad
        if off == 0:
            shifted = pooled
        else:
            # jnp.roll convention: result[i] = x[(i - shift) % n]  => shift=-off
            shifted = pltpu.roll(pooled, (-off) % channels, axis=0)
        valid = jnp.logical_and(ch + off >= 0, ch + off < channels)
        conv = conv + w_ref[j] * jnp.where(valid, shifted, jnp.float32(0.0))

    gate = jax.nn.sigmoid(conv)                                   # (C, 1) f32
    o_ref[0] = (x * gate.astype(x.dtype)).astype(o_ref.dtype)


# --------------------------------------------------------------------------
# Two-pass fallback kernels (oversized images).
# --------------------------------------------------------------------------
def _pool_sum_kernel(x_ref, sum_ref, *, hw, ragged):
    """Pass 1: accumulate per-channel sums over HW tiles.
    x_ref: (1, C, t_hw); sum_ref: (1, C, 1) f32, resident across the HW axis."""
    j = pl.program_id(1)

    @pl.when(j == 0)
    def _init():
        sum_ref[...] = jnp.zeros_like(sum_ref)

    x = x_ref[0].astype(jnp.float32)                              # (C, t_hw)
    if ragged:
        t_hw = x.shape[-1]
        col = jax.lax.broadcasted_iota(jnp.int32, x.shape, 1) + j * t_hw
        x = jnp.where(col < hw, x, 0.0)
    part = jnp.sum(x, axis=-1, keepdims=True)                     # (C, 1)
    sum_ref[...] = sum_ref[...] + part[None]


def _scale_kernel(x_ref, gate_ref, o_ref):
    """Pass 2: out = x * gate; gate (1, C, 1) broadcasts over the HW lanes."""
    o_ref[...] = (x_ref[...] * gate_ref[...]).astype(o_ref.dtype)


# --------------------------------------------------------------------------
# Wrapper
# --------------------------------------------------------------------------
@functools.partial(jax.jit, static_argnames=("max_hw_tile", "force_two_pass"))
def eca_block(x, conv_weight, max_hw_tile=None, force_two_pass=False):
    """ECA forward. x: (B, C, H, W); conv_weight: (k,). Returns (B, C, H, W)."""
    b, c, h, w = x.shape
    hw = h * w
    weights = conv_weight.reshape(-1).astype(jnp.float32)
    k_size = weights.shape[0]
    itemsize = jnp.dtype(x.dtype).itemsize

    x_r = x.reshape(b, c, hw)                     # free view; no transpose
    vmem_limit = _vmem_limit_bytes()

    # Fused footprint: 2x in + 2x out double-buffered blocks + one f32 temp.
    fused_bytes = c * hw * (4 * itemsize + 4)
    use_fused = (not force_two_pass) and fused_bytes <= int(0.9 * vmem_limit)

    if use_fused:
        out_r = pl.pallas_call(
            functools.partial(_eca_fused_kernel, hw=hw, k_size=k_size,
                              channels=c),
            out_shape=jax.ShapeDtypeStruct((b, c, hw), x.dtype),
            grid_spec=pltpu.PrefetchScalarGridSpec(
                num_scalar_prefetch=0,
                grid=(b,),
                in_specs=[
                    pl.BlockSpec(memory_space=pltpu.MemorySpace.SMEM),  # taps
                    pl.BlockSpec((1, c, hw), lambda i: (i, 0, 0)),
                ],
                out_specs=pl.BlockSpec((1, c, hw), lambda i: (i, 0, 0)),
            ),
            compiler_params=pltpu.CompilerParams(
                dimension_semantics=("parallel",),
                vmem_limit_bytes=vmem_limit,
            ),
        )(weights, x_r)
        return out_r.reshape(b, c, h, w)

    # ---------------- Two-pass fallback ----------------
    t_hw = _pick_hw_tile(hw, c, itemsize, vmem_limit, max_hw_tile)
    n_t = pl.cdiv(hw, t_hw)
    ragged = (hw % t_hw) != 0

    sums = pl.pallas_call(
        functools.partial(_pool_sum_kernel, hw=hw, ragged=ragged),
        out_shape=jax.ShapeDtypeStruct((b, c, 1), jnp.float32),
        grid_spec=pltpu.PrefetchScalarGridSpec(
            num_scalar_prefetch=0,
            grid=(b, n_t),
            in_specs=[pl.BlockSpec((1, c, t_hw), lambda i, j: (i, 0, j))],
            out_specs=pl.BlockSpec((1, c, 1), lambda i, j: (i, 0, 0)),
        ),
        compiler_params=pltpu.CompilerParams(
            dimension_semantics=("parallel", "arbitrary"),
            vmem_limit_bytes=vmem_limit,
        ),
    )(x_r)

    # Tiny k-tap channel conv + sigmoid on (B, C): plain JAX (O(B*C*k)).
    pooled = sums[:, :, 0] * (1.0 / hw)                           # (B, C) f32
    pad = (k_size - 1) // 2
    pooled_p = jnp.pad(pooled, ((0, 0), (pad, pad)))
    conv = jnp.zeros_like(pooled)
    for j in range(k_size):
        conv = conv + weights[j] * pooled_p[:, j:j + c]
    gate = jax.nn.sigmoid(conv).astype(x.dtype).reshape(b, c, 1)

    out_r = pl.pallas_call(
        _scale_kernel,
        out_shape=jax.ShapeDtypeStruct((b, c, hw), x.dtype),
        grid_spec=pltpu.PrefetchScalarGridSpec(
            num_scalar_prefetch=0,
            grid=(b, n_t),
            in_specs=[
                pl.BlockSpec((1, c, t_hw), lambda i, j: (i, 0, j)),
                pl.BlockSpec((1, c, 1), lambda i, j: (i, 0, 0)),
            ],
            out_specs=pl.BlockSpec((1, c, t_hw), lambda i, j: (i, 0, j)),
        ),
        compiler_params=pltpu.CompilerParams(
            dimension_semantics=("parallel", "parallel"),
            vmem_limit_bytes=vmem_limit,
        ),
    )(x_r, gate)

    return out_r.reshape(b, c, h, w)


# --------------------------------------------------------------------------
# Pure-JAX reference mirroring the PyTorch forward.
# --------------------------------------------------------------------------
def _reference(x, conv_weight):
    b, c, h, w = x.shape
    pooled = jnp.mean(x, axis=(2, 3))                             # (B, C)
    k_size = conv_weight.shape[0]
    pad = (k_size - 1) // 2
    pooled_p = jnp.pad(pooled, ((0, 0), (pad, pad)))
    conv = jnp.zeros_like(pooled)
    for j in range(k_size):
        conv = conv + conv_weight[j] * pooled_p[:, j:j + c]
    gate = jax.nn.sigmoid(conv)[:, :, None, None]
    return x * gate


def _run_case(x, conv_weight, **kwargs):
    ref = _reference(x, conv_weight)
    out = jax.block_until_ready(eca_block(x, conv_weight, **kwargs))
    np.testing.assert_allclose(np.asarray(out), np.asarray(ref),
                               rtol=1e-5, atol=1e-5)


if __name__ == "__main__":
    key = jax.random.PRNGKey(0)
    k1, k2, k3, k4 = jax.random.split(key, 4)

    # Case 1: fused single-pass path (default), k=3.
    x1 = jax.random.normal(k1, (2, 8, 16, 16), dtype=jnp.float32)
    w1 = jax.random.uniform(k2, (3,), dtype=jnp.float32) - 0.5
    _run_case(x1, w1)

    # Case 2: two-pass fallback, multiple HW tiles (accumulator path).
    _run_case(x1, w1, force_two_pass=True, max_hw_tile=128)

    # Case 3: fused path with k=5 and HW not a multiple of 128.
    x3 = jax.random.normal(k3, (1, 16, 12, 12), dtype=jnp.float32)
    w3 = jax.random.uniform(k4, (5,), dtype=jnp.float32) - 0.5
    _run_case(x3, w3)

    # Case 4: two-pass fallback with a ragged final HW tile (masking path).
    _run_case(x3, w3, force_two_pass=True, max_hw_tile=128)

    print("KERNEL_OK")
</pallas_src>

<mosaic_0001>
module attributes {stable_mosaic.version = 11 : i64} {
  func.func @_eca_fused_kernel(%arg0: i32, %arg1: memref<3xf32, #tpu.memory_space<smem>>, %arg2: memref<1x8x256xf32, #tpu.memory_space<vmem>>, %arg3: memref<1x8x256xf32, #tpu.memory_space<vmem>>) attributes {dimension_semantics = [#tpu.dimension_semantics<parallel>], iteration_bounds = array<i64: 2>, scalar_prefetch = 0 : i64, scratch_operands = 0 : i64, tpu.core_type = #tpu.core_type<tc>, window_params = [{transform_indices = @transform_0, window_bounds = array<i64: 3>}, {transform_indices = @transform_1, window_bounds = array<i64: 1, 8, 256>}, {transform_indices = @transform_2, window_bounds = array<i64: 1, 8, 256>}]} {
    %c0 = arith.constant 0 : index
    %c0_0 = arith.constant 0 : index
    %c0_1 = arith.constant 0 : index
    %0 = vector.load %arg2[%c0, %c0_0, %c0_1] : memref<1x8x256xf32, #tpu.memory_space<vmem>>, vector<1x8x256xf32>
    %1 = vector.shape_cast %0 : vector<1x8x256xf32> to vector<8x256xf32>
    %cst = arith.constant dense<0.000000e+00> : vector<8xf32>
    %2 = vector.multi_reduction <add>, %1, %cst [1] : vector<8x256xf32> to vector<8xf32>
    %3 = vector.shape_cast %2 : vector<8xf32> to vector<8x1xf32>
    %cst_2 = arith.constant 3.906250e-03 : f32
    %4 = vector.broadcast %cst_2 : f32 to vector<8x1xf32>
    %5 = arith.mulf %3, %4 : vector<8x1xf32>
    %6 = tpu.iota {dimensions = array<i32: 0>} : vector<8x1xi32>
    %cst_3 = arith.constant 0.000000e+00 : f32
    %7 = vector.broadcast %cst_3 : f32 to vector<8x1xf32>
    %c1_i32 = arith.constant 1 : i32
    %8 = tpu.dynamic_rotate %5 by %c1_i32 dim 0 : vector<8x1xf32>, i32 -> vector<8x1xf32>
    %c-1_i32 = arith.constant -1 : i32
    %9 = vector.broadcast %c-1_i32 : i32 to vector<8x1xi32>
    %10 = arith.addi %6, %9 : vector<8x1xi32>
    %c0_i32 = arith.constant 0 : i32
    %11 = vector.broadcast %c0_i32 : i32 to vector<8x1xi32>
    %12 = arith.cmpi sge, %10, %11 : vector<8x1xi32>
    %c-1_i32_4 = arith.constant -1 : i32
    %13 = vector.broadcast %c-1_i32_4 : i32 to vector<8x1xi32>
    %14 = arith.addi %6, %13 : vector<8x1xi32>
    %c8_i32 = arith.constant 8 : i32
    %15 = vector.broadcast %c8_i32 : i32 to vector<8x1xi32>
    %16 = arith.cmpi slt, %14, %15 : vector<8x1xi32>
    %17 = arith.andi %12, %16 : vector<8x1xi1>
    %c0_5 = arith.constant 0 : index
    %18 = memref.load %arg1[%c0_5] : memref<3xf32, #tpu.memory_space<smem>>
    %cst_6 = arith.constant 0.000000e+00 : f32
    %19 = vector.broadcast %cst_6 : f32 to vector<8x1xf32>
    %20 = arith.select %17, %8, %19 : vector<8x1xi1>, vector<8x1xf32>
    %21 = vector.broadcast %18 : f32 to vector<8x1xf32>
    %22 = arith.mulf %21, %20 : vector<8x1xf32>
    %23 = arith.addf %7, %22 : vector<8x1xf32>
    %c0_i32_7 = arith.constant 0 : i32
    %24 = vector.broadcast %c0_i32_7 : i32 to vector<8x1xi32>
    %25 = arith.addi %6, %24 : vector<8x1xi32>
    %c0_i32_8 = arith.constant 0 : i32
    %26 = vector.broadcast %c0_i32_8 : i32 to vector<8x1xi32>
    %27 = arith.cmpi sge, %25, %26 : vector<8x1xi32>
    %c0_i32_9 = arith.constant 0 : i32
    %28 = vector.broadcast %c0_i32_9 : i32 to vector<8x1xi32>
    %29 = arith.addi %6, %28 : vector<8x1xi32>
    %c8_i32_10 = arith.constant 8 : i32
    %30 = vector.broadcast %c8_i32_10 : i32 to vector<8x1xi32>
    %31 = arith.cmpi slt, %29, %30 : vector<8x1xi32>
    %32 = arith.andi %27, %31 : vector<8x1xi1>
    %c1 = arith.constant 1 : index
    %33 = memref.load %arg1[%c1] : memref<3xf32, #tpu.memory_space<smem>>
    %cst_11 = arith.constant 0.000000e+00 : f32
    %34 = vector.broadcast %cst_11 : f32 to vector<8x1xf32>
    %35 = arith.select %32, %5, %34 : vector<8x1xi1>, vector<8x1xf32>
    %36 = vector.broadcast %33 : f32 to vector<8x1xf32>
    %37 = arith.mulf %36, %35 : vector<8x1xf32>
    %38 = arith.addf %23, %37 : vector<8x1xf32>
    %c7_i32 = arith.constant 7 : i32
    %39 = tpu.dynamic_rotate %5 by %c7_i32 dim 0 : vector<8x1xf32>, i32 -> vector<8x1xf32>
    %c1_i32_12 = arith.constant 1 : i32
    %40 = vector.broadcast %c1_i32_12 : i32 to vector<8x1xi32>
    %41 = arith.addi %6, %40 : vector<8x1xi32>
    %c0_i32_13 = arith.constant 0 : i32
    %42 = vector.broadcast %c0_i32_13 : i32 to vector<8x1xi32>
    %43 = arith.cmpi sge, %41, %42 : vector<8x1xi32>
    %c1_i32_14 = arith.constant 1 : i32
    %44 = vector.broadcast %c1_i32_14 : i32 to vector<8x1xi32>
    %45 = arith.addi %6, %44 : vector<8x1xi32>
    %c8_i32_15 = arith.constant 8 : i32
    %46 = vector.broadcast %c8_i32_15 : i32 to vector<8x1xi32>
    %47 = arith.cmpi slt, %45, %46 : vector<8x1xi32>
    %48 = arith.andi %43, %47 : vector<8x1xi1>
    %c2 = arith.constant 2 : index
    %49 = memref.load %arg1[%c2] : memref<3xf32, #tpu.memory_space<smem>>
    %cst_16 = arith.constant 0.000000e+00 : f32
    %50 = vector.broadcast %cst_16 : f32 to vector<8x1xf32>
    %51 = arith.select %48, %39, %50 : vector<8x1xi1>, vector<8x1xf32>
    %52 = vector.broadcast %49 : f32 to vector<8x1xf32>
    %53 = arith.mulf %52, %51 : vector<8x1xf32>
    %54 = arith.addf %38, %53 : vector<8x1xf32>
    %55 = arith.negf %54 : vector<8x1xf32>
    %56 = math.exp %55 : vector<8x1xf32>
    %cst_17 = arith.constant 1.000000e+00 : f32
    %57 = vector.broadcast %cst_17 : f32 to vector<8x1xf32>
    %58 = arith.addf %57, %56 : vector<8x1xf32>
    %59 = arith.divf %57, %58 : vector<8x1xf32>
    %60 = vector.broadcast %59 : vector<8x1xf32> to vector<8x256xf32>
    %61 = arith.mulf %1, %60 : vector<8x256xf32>
    %c0_18 = arith.constant 0 : index
    %c0_19 = arith.constant 0 : index
    %c0_20 = arith.constant 0 : index
    %62 = vector.load %arg3[%c0_18, %c0_19, %c0_20] : memref<1x8x256xf32, #tpu.memory_space<vmem>>, vector<1x8x256xf32>
    %63 = vector.shape_cast %62 : vector<1x8x256xf32> to vector<8x256xf32>
    %64 = vector.shape_cast %61 : vector<8x256xf32> to vector<1x8x256xf32>
    tpu.vector_store %arg3[%c0_18, %c0_19, %c0_20], %64 {strides = array<i32>} : memref<1x8x256xf32, #tpu.memory_space<vmem>>, vector<1x8x256xf32>,
    return
  }
  func.func @transform_0(%arg0: i32) -> i32 {
    %c0_i32 = arith.constant 0 : i32
    %c0_i32_0 = arith.constant 0 : i32
    return %c0_i32 : i32
  }
  func.func @transform_1(%arg0: i32) -> (i32, i32, i32) {
    %c0_i32 = arith.constant 0 : i32
    %c0_i32_0 = arith.constant 0 : i32
    %c0_i32_1 = arith.constant 0 : i32
    return %arg0, %c0_i32, %c0_i32_0 : i32, i32, i32
  }
  func.func @transform_2(%arg0: i32) -> (i32, i32, i32) {
    %c0_i32 = arith.constant 0 : i32
    %c0_i32_0 = arith.constant 0 : i32
    %c0_i32_1 = arith.constant 0 : i32
    return %arg0, %c0_i32, %c0_i32_0 : i32, i32, i32
  }
}

</mosaic_0001>

<llo_original>
// kernel: eca_block.1
$region0: #{eca_block.1}
  #allocation0 [shape = 'u32[]', space=smem, size = 0x4, offset = 0x4, fixed_abs, tag = 'smem constant byte address 0x4 - core index']
  #allocation1 [shape = 'u32[144,128]{1,0:T(1,128)}', space=vmem, size = 0x12000, scoped, tag = 'internal scratch']
  %s0 = inlined_call_operand.vmem [shape: f32[3], index: 0, kind: input, shape index: {}]
  %s1 = inlined_call_operand.vmem [shape: f32[2,8,256], index: 1, kind: input, shape index: {}]
  %s2 = inlined_call_operand.vmem [shape: f32[2,8,256], index: 2, kind: output, shape index: {}]
  %s3 = sld [smem:[#allocation0]]
  $region45: #{eca_block.1} parent=0
    _
  %s5 = ssub.s32 1, %s3
  %s6 = scalar_select 0, %s5, %s3
  $region1: #{eca_block.1} parent=0
    #allocation2 [shape = 'u8[512]{0}', space=smem, size = 0x200, scoped, tag = 'input window, operand 0, single buffered']
    #allocation3 [shape = 's32[2]{0}', space=sflag, size = 0x8, scoped, tag = 'scoped memory for eca_block.1']
    %7 = vsyncpa [#allocation3], 0
    loop: start=0, step=1, limit=4
    $region2: #{eca_block.1} parent=1 // loop_pre_header
      _
    $region3: #{eca_block.1} parent=1 // loop_header
      %s9 = sphi 0, %s13
      %p10 = scmp.ge.s32.totalorder %s9, 4
      %s17 = sphi 0, %s17
      %s19 = sphi 0, %s17
      %s20 = sphi 0, %s19
      %s34 = sphi 0, %s20
      %s40 = sphi 0, %s42
      %s43 = sphi 0, %s40
      %s44 = sphi 0, %s43
      %s60 = sphi 0, %s44
      %s66 = sphi 0, %s68
      %s69 = sphi 0, %s66
      %s70 = sphi 0, %s69
      %s86 = sphi 0, %s70
    $region4: #{eca_block.1} parent=1 // loop_header_branch
      %12 = sbr.rel (%p10) target = $region8
    $region5: #{eca_block.1} parent=1 // loop_body
      %s14 = ssub.s32 %s9, 1
      %s15 = ssub.s32 %s9, 2
      %s16 = sadd.s32 %s9, 1
      %s18 = sadd.s32 %s17, 1
      %p21 = scmp.eq.s32.totalorder %s9, 1
      %p22 = scmp.ne.s32.totalorder %s17, %s19
      %p23 = scmp.eq.s32.totalorder %s9, 0
      %p24 = por %p22, %p23
      %p25 = scmp.ne.s32.totalorder %s17, %s19
      %p26 = scmp.eq.s32.totalorder %s14, 1
      %p27 = por %p25, %p26
      %p28 = scmp.ne.s32.totalorder %s19, %s20
      %p29 = scmp.eq.s32.totalorder %s14, 0
      %p30 = por %p28, %p29
      %p31 = scmp.ne.s32.totalorder %s19, %s20
      %p32 = scmp.eq.s32.totalorder %s15, 1
      %p33 = por %p31, %p32
      %p35 = scmp.ne.s32.totalorder %s20, %s34
      %p36 = scmp.eq.s32.totalorder %s15, 0
      %p37 = por %p35, %p36
      %s38 = ssub.s32 %s9, %s16
      %p39 = scmp.eq.s32.totalorder %s38, 0
      %s41 = sadd.s32 %s40, 1
      %s42 = scalar_select %p39, %s40, %s41
      %p45 = pneg %p39
      %p46 = scmp.eq.s32.totalorder %s9, 1
      %p47 = por %p45, %p46
      %p48 = scmp.ne.s32.totalorder %s40, %s43
      %p49 = scmp.eq.s32.totalorder %s9, 0
      %p50 = por %p48, %p49
      %p51 = scmp.ne.s32.totalorder %s40, %s43
      %p52 = scmp.eq.s32.totalorder %s14, 1
      %p53 = por %p51, %p52
      %p54 = scmp.ne.s32.totalorder %s43, %s44
      %p55 = scmp.eq.s32.totalorder %s14, 0
      %p56 = por %p54, %p55
      %p57 = scmp.ne.s32.totalorder %s43, %s44
      %p58 = scmp.eq.s32.totalorder %s15, 1
      %p59 = por %p57, %p58
      %p61 = scmp.ne.s32.totalorder %s44, %s60
      %p62 = scmp.eq.s32.totalorder %s15, 0
      %p63 = por %p61, %p62
      %s64 = ssub.s32 %s9, %s16
      %p65 = scmp.eq.s32.totalorder %s64, 0
      %s67 = sadd.s32 %s66, 1
      %s68 = scalar_select %p65, %s66, %s67
      %p71 = pneg %p65
      %p72 = scmp.eq.s32.totalorder %s9, 1
      %p73 = por %p71, %p72
      %p74 = scmp.ne.s32.totalorder %s66, %s69
      %p75 = scmp.eq.s32.totalorder %s9, 0
      %p76 = por %p74, %p75
      %p77 = scmp.ne.s32.totalorder %s66, %s69
      %p78 = scmp.eq.s32.totalorder %s14, 1
      %p79 = por %p77, %p78
      %p80 = scmp.ne.s32.totalorder %s69, %s70
      %p81 = scmp.eq.s32.totalorder %s14, 0
      %p82 = por %p80, %p81
      %p83 = scmp.ne.s32.totalorder %s69, %s70
      %p84 = scmp.eq.s32.totalorder %s15, 1
      %p85 = por %p83, %p84
      %p87 = scmp.ne.s32.totalorder %s70, %s86
      %p88 = scmp.eq.s32.totalorder %s15, 0
      %p89 = por %p87, %p88
      %p90 = scmp.le.s32.totalorder 1, %s9
      %p91 = scmp.lt.s32.totalorder %s9, 3
      %p92 = pnand %p90, %p91
      %p93 = pneg %p92
      // Predicated region
      $region9: #{eca_block.1} parent=5 // pred_check
        _
      $region10: #{eca_block.1} parent=5 // pred_check_branch
        %95 = sbr.rel (%p92) target = $region12
      $region11: #{eca_block.1} parent=5 // pred_region
        %s96 = ssub.s32 %s9, 1
        // Predicated region
        $region13: #{eca_block.1} parent=11 // pred_check
          %p97 = pneg %p30
        $region14: #{eca_block.1} parent=11 // pred_check_branch
          %99 = sbr.rel (%p97) target = $region16
        $region15: #{eca_block.1} parent=11 // pred_region
          %s101 = ssub.s32 16, 16
          %102 = vsyncadd [#allocation3], %s101
          %s104 = sshll.u32 %s0, 4
          %s105 = int_to_ptr.vmem [resolvable:$true] %s104
          %107 = dma.vmem_to_smem %s105, 16, [#allocation2], [#allocation3]
        $region16: #{eca_block.1} parent=11 // pred_fallthru
          _
      $region12: #{eca_block.1} parent=5 // pred_fallthru
        _
      %p108 = scmp.lt.s32.totalorder %s9, 2
      // Predicated region
      $region17: #{eca_block.1} parent=5 // pred_check
        %p109 = pneg %p108
      $region18: #{eca_block.1} parent=5 // pred_check_branch
        %111 = sbr.rel (%p109) target = $region20
      $region19: #{eca_block.1} parent=5 // pred_region
        // Predicated region
        $region21: #{eca_block.1} parent=19 // pred_check
          %p112 = pneg %p50
        $region22: #{eca_block.1} parent=19 // pred_check_branch
          %114 = sbr.rel (%p112) target = $region24
        $region23: #{eca_block.1} parent=19 // pred_region
          %p115 = scmp.lt.s32.totalorder %s9, 1
          %s116 = scalar_select %p115, %s9, 1
          %s117 = smul.addr %s116, 2
          %s118 = smul.addr %s117, 8
          %s119 = scalar_lea.vmem %s1, %s118
        $region24: #{eca_block.1} parent=19 // pred_fallthru
          _
      $region20: #{eca_block.1} parent=5 // pred_fallthru
        _
      %p120 = scmp.le.s32.totalorder 1, %s9
      %p121 = scmp.lt.s32.totalorder %s9, 3
      %p122 = pnand %p120, %p121
      %p123 = pneg %p122
      // Predicated region
      $region25: #{eca_block.1} parent=5 // pred_check
        _
      $region26: #{eca_block.1} parent=5 // pred_check_branch
        %125 = sbr.rel (%p122) target = $region28
      $region27: #{eca_block.1} parent=5 // pred_region
        %s126 = ssub.s32 %s9, 1
        // Predicated region
        $region29: #{eca_block.1} parent=27 // pred_check
          %p127 = pneg %p30
        $region30: #{eca_block.1} parent=27 // pred_check_branch
          %129 = sbr.rel (%p127) target = $region32
        $region31: #{eca_block.1} parent=27 // pred_region
          %130 = dma.done [#allocation3], 16
        $region32: #{eca_block.1} parent=27 // pred_fallthru
          _
        %131 = sfence
        %p132 = pneg %p30
        %p133 = pneg %p27
        %p134 = scmp.lt.s32.totalorder %s14, 1
        %s135 = scalar_select %p134, %s14, 1
        %s136 = smul.addr %s135, 2
        %s137 = smul.addr %s136, 8
        %s138 = scalar_lea.vmem %s1, %s137
        %p139 = pneg %p56
        %p140 = pneg %p53
        %p141 = pneg %p82
        %p142 = pneg %p79
        %p143 = scmp.lt.s32.totalorder %s14, 1
        %s144 = scalar_select %p143, %s14, 1
        %s145 = smul.addr %s144, 2
        %s146 = smul.addr %s145, 8
        %s147 = scalar_lea.vmem %s2, %s146
        %p148 = scmp.lt.s32.totalorder %s14, 1
        %s149 = scalar_select %p148, %s14, 1
        %s150 = smul.addr %s149, 2
        %s151 = smul.addr %s150, 8
        %s152 = scalar_lea.vmem %s1, %s151
        %p153 = scmp.lt.s32.totalorder %s14, 1
        %s154 = scalar_select %p153, %s14, 1
        %s155 = smul.addr %s154, 2
        %s156 = smul.addr %s155, 8
        %s157 = scalar_lea.vmem %s2, %s156
        %v158 = vld [vmem:[%s152] sm:$0xff]
        %v159 = vld [vmem:[%s152 + $0x8] sm:$0xff]
        %v160 = vadd.f32 %v158, %v159
        %161 = vadd.xlane.f32.xlu0 %v160
        %v162 = vpop.xlane.xlu0 %161
        %v163 = vmul.f32 %v162, 0.00390625
        %v164 = vlaneseq
        %v165 = vshrl.u32 %v164, 7
        %v166 = vrot.slane %v163, 7
        %v167 = vadd.s32 %v165, 4294967295
        %vm168 = vcmp.ge.s32.totalorder %v167, 0
        %vm169 = vcmp.lt.s32.totalorder %v167, 8
        %vm170 = vmand %vm168, %vm169
        %s171 = sld [smem:[#allocation2]]
        %v172 = vsel %vm170, %v166, 0.0
        %v173 = vstv %s171
        %v174 = vmul.f32 %v173, %v172
        %v175 = vadd.f32 %v174, 0.0
        %vm176 = vcmp.ge.s32.totalorder %v165, 0
        %vm177 = vcmp.lt.s32.totalorder %v165, 8
        %vm178 = vmand %vm176, %vm177
        %s179 = sld [smem:[#allocation2 + $0x1]]
        %v180 = vsel %vm178, %v163, 0.0
        %v181 = vstv %s179
        %v182 = vmul.f32 %v181, %v180
        %v183 = vadd.f32 %v175, %v182
        %v184 = vrot.slane %v163, 1
        %v185 = vadd.s32 %v165, 1
        %vm186 = vcmp.ge.s32.totalorder %v185, 0
        %vm187 = vcmp.lt.s32.totalorder %v185, 8
        %vm188 = vmand %vm186, %vm187
        %s189 = sld [smem:[#allocation2 + $0x2]]
        %v190 = vsel %vm188, %v184, 0.0
        %v191 = vstv %s189
        %v192 = vmul.f32 %v191, %v190
        %v193 = vadd.f32 %v183, %v192
        %v194 = vxor.u32 %v193, 2147483648
        %v195 = vmul.f32 %v194, 1.442695
        %v196 = vpow.pop %v195
        %v197 = vadd.f32 %v196, 1.0
        %v198 = vrcp.pop %v197
        %v199 = vmul.f32 1.0, %v198
        %201 = vset.pattern.permute.xlu0 0
        %202 = vperm.xlu0 %201, %v199
        %v203 = vpop.permute.xlu0 %202
        %v205 = vmul.f32 %v158, %v203
        %v206 = vmul.f32 %v159, %v203
        %207 = vst [vmem:[%s157] sm:$0xff] %v205
        %208 = vst [vmem:[%s157 + $0x8] sm:$0xff] %v206
        %p209 = scmp.lt.s32.totalorder %s14, 1
        %s210 = scalar_select %p209, %s14, 1
        %s211 = smul.addr %s210, 2
        %s212 = smul.addr %s211, 8
        %s213 = scalar_lea.vmem %s2, %s212
        // Predicated region
        $region33: #{eca_block.1} parent=27 // pred_check
          %p214 = pneg %p79
        $region34: #{eca_block.1} parent=27 // pred_check_branch
          %216 = sbr.rel (%p214) target = $region36
        $region35: #{eca_block.1} parent=27 // pred_region
          _
        $region36: #{eca_block.1} parent=27 // pred_fallthru
          _
      $region28: #{eca_block.1} parent=5 // pred_fallthru
        _
      %p217 = scmp.le.s32.totalorder 2, %s9
      // Predicated region
      $region37: #{eca_block.1} parent=5 // pred_check
        %p218 = pneg %p217
      $region38: #{eca_block.1} parent=5 // pred_check_branch
        %220 = sbr.rel (%p218) target = $region40
      $region39: #{eca_block.1} parent=5 // pred_region
        %s221 = ssub.s32 %s9, 2
        // Predicated region
        $region41: #{eca_block.1} parent=39 // pred_check
          %p222 = pneg %p85
        $region42: #{eca_block.1} parent=39 // pred_check_branch
          %224 = sbr.rel (%p222) target = $region44
        $region43: #{eca_block.1} parent=39 // pred_region
          %p225 = scmp.lt.s32.totalorder %s15, 1
          %s226 = scalar_select %p225, %s15, 1
          %s227 = smul.addr %s226, 2
          %s228 = smul.addr %s227, 8
          %s229 = scalar_lea.vmem %s2, %s228
        $region44: #{eca_block.1} parent=39 // pred_fallthru
          _
      $region40: #{eca_block.1} parent=5 // pred_fallthru
        _
    $region6: #{eca_block.1} parent=1 // loop_footer
      %s13 = sadd.s32 1, %s9
    $region7: #{eca_block.1} parent=1 // loop_footer_branch
      %8 = sbr.rel target = $region3
    $region8: #{eca_block.1} parent=1 // loop_exit
      _
    %230 = vsyncpa [#allocation3], 1
    %s231 = scalar_lea.sflag [#allocation3], 1
    %232 = vsyncpa %s231, 1

</llo_original>
